<compile_context>
chip_gen: v6e
topology: v6e:2x2x1
jax: 0.10.0
libtpu: 0.0.40
codegen_flags: <defaults>
</compile_context>

<pallas_src>
import functools

import jax
import jax.numpy as jnp
import numpy as np
from jax.experimental import pallas as pl
from jax.experimental.pallas import tpu as pltpu


def _dla_kernel(x_ref, y_ref, p_ref, w_ref, o_ref, *, factor, eps):
    x = x_ref[...]                       # (B, C) f32
    y = y_ref[...]                       # (B, C) f32 (one-hot style labels)
    p = p_ref[...]                       # (8, C): rows = [b1, g1, be1, b2, g2, be2, pad, pad]
    C = x.shape[1]

    b1, g1, be1 = p[0:1, :], p[1:2, :], p[2:3, :]
    b2, g2, be2 = p[3:4, :], p[4:5, :], p[5:6, :]

    def linear(h, wt, b):
        # PyTorch nn.Linear: h @ w.T + b.  w.T is precomputed in the wrapper, so this
        # is a single (padded) MXU push down the vector-extended slot; the VPU/XLU
        # stay free for BN and custom_add.
        return jnp.dot(h, wt, preferred_element_type=jnp.float32) + b

    def batchnorm(h, gamma, beta):
        # BatchNorm1d(track_running_stats=False): batch statistics, biased variance.
        # Fused stats: one sublane reduce over the lane-concatenated [h, h*h] vreg.
        stats = jnp.mean(jnp.concatenate([h, h * h], axis=1), axis=0, keepdims=True)
        mu, ex2 = stats[:, :C], stats[:, C:]
        var = ex2 - mu * mu
        return (h - mu) * jax.lax.rsqrt(var + eps) * gamma + beta

    def custom_add(h):
        # custom(x, y, factor) followed by torch.add(out, out_):
        #   out = inverse(y)*x + y * max(|x|, dim=1, keepdim) * factor
        # Since inverse(y) is 1 exactly where y == 0 (else 0), this is one select:
        max_val = jnp.max(jnp.abs(h), axis=1, keepdims=True) * factor   # (B, 1) lane reduce
        return jnp.where(y == 0.0, h, y * max_val)

    out = custom_add(batchnorm(linear(x, w_ref[0], b1), g1, be1))
    out = custom_add(batchnorm(linear(out, w_ref[1], b2), g2, be2))

    # TODO(synk): the module's in-graph data-dependent Python assert
    # `assert all(argmax(out)==argmax(y))` has no in-kernel equivalent; it is
    # replayed on the host after the kernel.
    o_ref[...] = out.astype(o_ref.dtype)


def pack_params(b1, g1, be1, b2, g2, be2):
    """Pack the six (C,) vectors into a single (8, C) f32 array (2 zero pad rows)."""
    C = b1.shape[0]
    pad = jnp.zeros((C,), jnp.float32)
    return jnp.stack(
        [b1, g1, be1, b2, g2, be2, pad, pad], axis=0).astype(jnp.float32)


def pack_weights(w1, w2):
    """Pre-transpose the PyTorch-layout weights and stack -> (2, C, C) f32."""
    return jnp.stack([w1.T, w2.T], axis=0).astype(jnp.float32)


def dla_forward(x, y, params, weights_t, *, factor=3, eps=1e-5):
    """x, y: (B, C).  params: (8, C) packed rows.  weights_t: (2, C, C) transposed."""
    B, C = x.shape
    kernel = functools.partial(_dla_kernel, factor=float(factor), eps=float(eps))
    return pl.pallas_call(
        kernel,
        out_shape=jax.ShapeDtypeStruct((B, C), x.dtype),
        in_specs=[pl.BlockSpec(memory_space=pltpu.MemorySpace.VMEM)] * 4,
        out_specs=pl.BlockSpec(memory_space=pltpu.MemorySpace.VMEM),
    )(x, y, params, weights_t)


def dla_ref(x, y, w1, b1, w2, b2, g1, be1, g2, be2, *, factor=3, eps=1e-5):
    """Pure-JAX reference mirroring the PyTorch forward (batch-stat BN)."""
    def bn(h, g, b):
        mu = h.mean(axis=0, keepdims=True)
        var = ((h - mu) ** 2).mean(axis=0, keepdims=True)
        return (h - mu) / jnp.sqrt(var + eps) * g + b

    def custom_add(h):
        mv = jnp.max(jnp.abs(h), axis=1, keepdims=True) * factor
        y_inv = (y == 0).astype(h.dtype)
        return y_inv * h + y * mv

    out = x @ w1.T + b1
    out = custom_add(bn(out, g1, be1))
    out = out @ w2.T + b2
    out = custom_add(bn(out, g2, be2))
    return out


if __name__ == "__main__":
    # dla(classes=16, factor=3) on a small batch.
    B, C = 8, 16
    factor = 3

    key = jax.random.PRNGKey(0)
    kx, ky, kw1, kw2 = jax.random.split(key, 4)
    x = jax.random.normal(kx, (B, C), jnp.float32)
    labels = jax.random.randint(ky, (B,), 0, C)
    y = jax.nn.one_hot(labels, C, dtype=jnp.float32)

    # nn.init.normal_(weight, 0, 1); bias zeroed (per _init_weights).
    w1 = jax.random.normal(kw1, (C, C), jnp.float32)
    b1 = jnp.zeros((C,), jnp.float32)
    w2 = jax.random.normal(kw2, (C, C), jnp.float32)
    b2 = jnp.zeros((C,), jnp.float32)
    # BatchNorm1d affine defaults: weight=1, bias=0.
    g1 = jnp.ones((C,), jnp.float32)
    be1 = jnp.zeros((C,), jnp.float32)
    g2 = jnp.ones((C,), jnp.float32)
    be2 = jnp.zeros((C,), jnp.float32)

    # Pack once (constants at the call site, folded by XLA).
    params = pack_params(b1, g1, be1, b2, g2, be2)
    weights_t = pack_weights(w1, w2)

    out = jax.block_until_ready(
        dla_forward(x, y, params, weights_t, factor=factor))
    ref = dla_ref(x, y, w1, b1, w2, b2, g1, be1, g2, be2, factor=factor)

    assert out.shape == (B, C), out.shape
    np.testing.assert_allclose(np.asarray(out), np.asarray(ref), rtol=1e-3, atol=1e-3)
    # Replay the module's forward-pass assert on the host.
    assert bool(jnp.all(jnp.argmax(out, axis=1) == jnp.argmax(y, axis=1)))
    print("KERNEL_OK")
</pallas_src>

<mosaic_0001>
module attributes {stable_mosaic.version = 11 : i64} {
  func.func @_dla_kernel(%arg0: memref<8x16xf32, #tpu.memory_space<vmem>>, %arg1: memref<8x16xf32, #tpu.memory_space<vmem>>, %arg2: memref<8x16xf32, #tpu.memory_space<vmem>>, %arg3: memref<2x16x16xf32, #tpu.memory_space<vmem>>, %arg4: memref<8x16xf32, #tpu.memory_space<vmem>>) attributes {dimension_semantics = [], scalar_prefetch = 0 : i64, scratch_operands = 0 : i64, tpu.core_type = #tpu.core_type<tc>} {
    %c0 = arith.constant 0 : index
    %c0_0 = arith.constant 0 : index
    %0 = vector.load %arg0[%c0, %c0_0] : memref<8x16xf32, #tpu.memory_space<vmem>>, vector<8x16xf32>
    %c0_1 = arith.constant 0 : index
    %c0_2 = arith.constant 0 : index
    %1 = vector.load %arg1[%c0_1, %c0_2] : memref<8x16xf32, #tpu.memory_space<vmem>>, vector<8x16xf32>
    %c0_3 = arith.constant 0 : index
    %c0_4 = arith.constant 0 : index
    %2 = vector.load %arg2[%c0_3, %c0_4] : memref<8x16xf32, #tpu.memory_space<vmem>>, vector<8x16xf32>
    %3 = vector.extract_strided_slice %2 {offsets = [0, 0], sizes = [1, 16], strides = [1, 1]} : vector<8x16xf32> to vector<1x16xf32>
    %4 = vector.extract_strided_slice %2 {offsets = [1, 0], sizes = [1, 16], strides = [1, 1]} : vector<8x16xf32> to vector<1x16xf32>
    %5 = vector.extract_strided_slice %2 {offsets = [2, 0], sizes = [1, 16], strides = [1, 1]} : vector<8x16xf32> to vector<1x16xf32>
    %6 = vector.extract_strided_slice %2 {offsets = [3, 0], sizes = [1, 16], strides = [1, 1]} : vector<8x16xf32> to vector<1x16xf32>
    %7 = vector.extract_strided_slice %2 {offsets = [4, 0], sizes = [1, 16], strides = [1, 1]} : vector<8x16xf32> to vector<1x16xf32>
    %8 = vector.extract_strided_slice %2 {offsets = [5, 0], sizes = [1, 16], strides = [1, 1]} : vector<8x16xf32> to vector<1x16xf32>
    %c0_5 = arith.constant 0 : index
    %c0_6 = arith.constant 0 : index
    %c0_7 = arith.constant 0 : index
    %9 = vector.load %arg3[%c0_5, %c0_6, %c0_7] : memref<2x16x16xf32, #tpu.memory_space<vmem>>, vector<1x16x16xf32>
    %10 = vector.shape_cast %9 : vector<1x16x16xf32> to vector<16x16xf32>
    %cst = arith.constant dense<0.000000e+00> : vector<8x16xf32>
    %11 = tpu.matmul %0, %10, %cst {dimension_numbers = #tpu.dot_dimension_numbers<[1], [0], [0], [1], [0, 0, 1, 1], [], []>} : vector<8x16xf32>, vector<16x16xf32>, vector<8x16xf32> -> vector<8x16xf32>
    %12 = vector.broadcast %3 : vector<1x16xf32> to vector<8x16xf32>
    %13 = arith.addf %11, %12 : vector<8x16xf32>
    %14 = arith.mulf %13, %13 : vector<8x16xf32>
    %15 = tpu.concatenate %13, %14 in 1 : vector<8x16xf32>, vector<8x16xf32> -> vector<8x32xf32>
    %cst_8 = arith.constant dense<0.000000e+00> : vector<32xf32>
    %16 = vector.multi_reduction <add>, %15, %cst_8 [0] : vector<8x32xf32> to vector<32xf32>
    %17 = vector.shape_cast %16 : vector<32xf32> to vector<1x32xf32>
    %cst_9 = arith.constant 8.000000e+00 : f32
    %18 = vector.broadcast %cst_9 : f32 to vector<1x32xf32>
    %19 = arith.divf %17, %18 : vector<1x32xf32>
    %20 = vector.extract_strided_slice %19 {offsets = [0, 0], sizes = [1, 16], strides = [1, 1]} : vector<1x32xf32> to vector<1x16xf32>
    %21 = vector.extract_strided_slice %19 {offsets = [0, 16], sizes = [1, 16], strides = [1, 1]} : vector<1x32xf32> to vector<1x16xf32>
    %22 = arith.mulf %20, %20 : vector<1x16xf32>
    %23 = arith.subf %21, %22 : vector<1x16xf32>
    %24 = vector.broadcast %20 : vector<1x16xf32> to vector<8x16xf32>
    %25 = arith.subf %13, %24 : vector<8x16xf32>
    %cst_10 = arith.constant 9.99999974E-6 : f32
    %26 = vector.broadcast %cst_10 : f32 to vector<1x16xf32>
    %27 = arith.addf %23, %26 : vector<1x16xf32>
    %28 = math.rsqrt %27 : vector<1x16xf32>
    %29 = vector.broadcast %28 : vector<1x16xf32> to vector<8x16xf32>
    %30 = arith.mulf %25, %29 : vector<8x16xf32>
    %31 = vector.broadcast %4 : vector<1x16xf32> to vector<8x16xf32>
    %32 = arith.mulf %30, %31 : vector<8x16xf32>
    %33 = vector.broadcast %5 : vector<1x16xf32> to vector<8x16xf32>
    %34 = arith.addf %32, %33 : vector<8x16xf32>
    %35 = math.absf %34 : vector<8x16xf32>
    %cst_11 = arith.constant dense<0xFF800000> : vector<8xf32>
    %36 = vector.multi_reduction <maximumf>, %35, %cst_11 [1] : vector<8x16xf32> to vector<8xf32>
    %37 = vector.shape_cast %36 : vector<8xf32> to vector<8x1xf32>
    %cst_12 = arith.constant 3.000000e+00 : f32
    %38 = vector.broadcast %cst_12 : f32 to vector<8x1xf32>
    %39 = arith.mulf %37, %38 : vector<8x1xf32>
    %cst_13 = arith.constant 0.000000e+00 : f32
    %40 = vector.broadcast %cst_13 : f32 to vector<8x16xf32>
    %41 = arith.cmpf oeq, %1, %40 : vector<8x16xf32>
    %42 = vector.broadcast %39 : vector<8x1xf32> to vector<8x16xf32>
    %43 = arith.mulf %1, %42 : vector<8x16xf32>
    %44 = arith.select %41, %34, %43 : vector<8x16xi1>, vector<8x16xf32>
    %c1 = arith.constant 1 : index
    %c0_14 = arith.constant 0 : index
    %c0_15 = arith.constant 0 : index
    %45 = vector.load %arg3[%c1, %c0_14, %c0_15] : memref<2x16x16xf32, #tpu.memory_space<vmem>>, vector<1x16x16xf32>
    %46 = vector.shape_cast %45 : vector<1x16x16xf32> to vector<16x16xf32>
    %cst_16 = arith.constant dense<0.000000e+00> : vector<8x16xf32>
    %47 = tpu.matmul %44, %46, %cst_16 {dimension_numbers = #tpu.dot_dimension_numbers<[1], [0], [0], [1], [0, 0, 1, 1], [], []>} : vector<8x16xf32>, vector<16x16xf32>, vector<8x16xf32> -> vector<8x16xf32>
    %48 = vector.broadcast %6 : vector<1x16xf32> to vector<8x16xf32>
    %49 = arith.addf %47, %48 : vector<8x16xf32>
    %50 = arith.mulf %49, %49 : vector<8x16xf32>
    %51 = tpu.concatenate %49, %50 in 1 : vector<8x16xf32>, vector<8x16xf32> -> vector<8x32xf32>
    %cst_17 = arith.constant dense<0.000000e+00> : vector<32xf32>
    %52 = vector.multi_reduction <add>, %51, %cst_17 [0] : vector<8x32xf32> to vector<32xf32>
    %53 = vector.shape_cast %52 : vector<32xf32> to vector<1x32xf32>
    %cst_18 = arith.constant 8.000000e+00 : f32
    %54 = vector.broadcast %cst_18 : f32 to vector<1x32xf32>
    %55 = arith.divf %53, %54 : vector<1x32xf32>
    %56 = vector.extract_strided_slice %55 {offsets = [0, 0], sizes = [1, 16], strides = [1, 1]} : vector<1x32xf32> to vector<1x16xf32>
    %57 = vector.extract_strided_slice %55 {offsets = [0, 16], sizes = [1, 16], strides = [1, 1]} : vector<1x32xf32> to vector<1x16xf32>
    %58 = arith.mulf %56, %56 : vector<1x16xf32>
    %59 = arith.subf %57, %58 : vector<1x16xf32>
    %60 = vector.broadcast %56 : vector<1x16xf32> to vector<8x16xf32>
    %61 = arith.subf %49, %60 : vector<8x16xf32>
    %cst_19 = arith.constant 9.99999974E-6 : f32
    %62 = vector.broadcast %cst_19 : f32 to vector<1x16xf32>
    %63 = arith.addf %59, %62 : vector<1x16xf32>
    %64 = math.rsqrt %63 : vector<1x16xf32>
    %65 = vector.broadcast %64 : vector<1x16xf32> to vector<8x16xf32>
    %66 = arith.mulf %61, %65 : vector<8x16xf32>
    %67 = vector.broadcast %7 : vector<1x16xf32> to vector<8x16xf32>
    %68 = arith.mulf %66, %67 : vector<8x16xf32>
    %69 = vector.broadcast %8 : vector<1x16xf32> to vector<8x16xf32>
    %70 = arith.addf %68, %69 : vector<8x16xf32>
    %71 = math.absf %70 : vector<8x16xf32>
    %cst_20 = arith.constant dense<0xFF800000> : vector<8xf32>
    %72 = vector.multi_reduction <maximumf>, %71, %cst_20 [1] : vector<8x16xf32> to vector<8xf32>
    %73 = vector.shape_cast %72 : vector<8xf32> to vector<8x1xf32>
    %cst_21 = arith.constant 3.000000e+00 : f32
    %74 = vector.broadcast %cst_21 : f32 to vector<8x1xf32>
    %75 = arith.mulf %73, %74 : vector<8x1xf32>
    %cst_22 = arith.constant 0.000000e+00 : f32
    %76 = vector.broadcast %cst_22 : f32 to vector<8x16xf32>
    %77 = arith.cmpf oeq, %1, %76 : vector<8x16xf32>
    %78 = vector.broadcast %75 : vector<8x1xf32> to vector<8x16xf32>
    %79 = arith.mulf %1, %78 : vector<8x16xf32>
    %80 = arith.select %77, %70, %79 : vector<8x16xi1>, vector<8x16xf32>
    %c0_23 = arith.constant 0 : index
    %c0_24 = arith.constant 0 : index
    %81 = vector.load %arg4[%c0_23, %c0_24] : memref<8x16xf32, #tpu.memory_space<vmem>>, vector<8x16xf32>
    tpu.vector_store %arg4[%c0_23, %c0_24], %80 {strides = array<i32>} : memref<8x16xf32, #tpu.memory_space<vmem>>, vector<8x16xf32>,
    return
  }
}

</mosaic_0001>

<llo_original>
// kernel: tpu_custom_call.1
$region0: #{tpu_custom_call.1}
  #allocation0 [shape = 'u32[]', space=smem, size = 0x4, offset = 0x4, fixed_abs, tag = 'smem constant byte address 0x4 - core index']
  #allocation1 [shape = 'u32[144,128]{1,0:T(1,128)}', space=vmem, size = 0x12000, scoped, tag = 'internal scratch']
  %s0 = inlined_call_operand.hbm [shape: f32[8,16], index: 0, kind: input, shape index: {}]
  %s1 = inlined_call_operand.hbm [shape: f32[8,16], index: 1, kind: input, shape index: {}]
  %s2 = inlined_call_operand.hbm [shape: f32[8,16], index: 2, kind: input, shape index: {}]
  %s3 = inlined_call_operand.hbm [shape: f32[2,16,16], index: 3, kind: input, shape index: {}]
  %s4 = inlined_call_operand.hbm [shape: f32[8,16], index: 4, kind: output, shape index: {}]
  %s5 = sld [smem:[#allocation0]]
  $region42: #{tpu_custom_call.1} parent=0
    _
  %s7 = ssub.s32 1, %s5
  %s8 = scalar_select 0, %s7, %s5
  $region1: #{tpu_custom_call.1} parent=0
    #allocation2 [shape = 'u8[4096]{0}', space=vmem, size = 0x1000, scoped, tag = 'input window, operand 0, single buffered']
    #allocation3 [shape = 's32[1]{0}', space=sflag, size = 0x4, scoped, tag = 'scoped memory for tpu_custom_call.1']
    #allocation4 [shape = 's32[1]{0}', space=sflag, size = 0x4, scoped, tag = 'scoped memory for tpu_custom_call.1']
    #allocation5 [shape = 'u8[4096]{0}', space=vmem, size = 0x1000, scoped, tag = 'input window, operand 1, single buffered']
    #allocation6 [shape = 's32[1]{0}', space=sflag, size = 0x4, scoped, tag = 'scoped memory for tpu_custom_call.1']
    #allocation7 [shape = 'u8[4096]{0}', space=vmem, size = 0x1000, scoped, tag = 'input window, operand 2, single buffered']
    #allocation8 [shape = 'u8[16384]{0}', space=vmem, size = 0x4000, scoped, tag = 'input window, operand 3, single buffered']
    #allocation9 [shape = 's32[1]{0}', space=sflag, size = 0x4, scoped, tag = 'scoped memory for tpu_custom_call.1']
    #allocation10 [shape = 'u8[4096]{0}', space=vmem, size = 0x1000, scoped, tag = 'output window, operand 0, single buffered']
    %9 = vsyncpa [#allocation3], 0
    %10 = vsyncpa [#allocation6], 0
    %11 = vsyncpa [#allocation9], 0
    %12 = vsyncpa [#allocation4], 0
    // Predicated region
    $region2: #{tpu_custom_call.1} parent=1 // pred_check
      _
    $region3: #{tpu_custom_call.1} parent=1 // pred_check_branch
      %14 = sbr.rel (0) target = $region5
    $region4: #{tpu_custom_call.1} parent=1 // pred_region
      %s16 = ssub.s32 128, 128
      %17 = vsyncadd [#allocation3], %s16
      %s19 = sshll.u32 [#allocation2], 4
      %s20 = int_to_ptr.vmem [resolvable:$true] %s19
      %22 = dma.hbm_to_vmem [thread:$0]  %s0, 128, %s20, [#allocation3]
    $region5: #{tpu_custom_call.1} parent=1 // pred_fallthru
      _
    // Predicated region
    $region6: #{tpu_custom_call.1} parent=1 // pred_check
      _
    $region7: #{tpu_custom_call.1} parent=1 // pred_check_branch
      %24 = sbr.rel (0) target = $region9
    $region8: #{tpu_custom_call.1} parent=1 // pred_region
      %s26 = ssub.s32 128, 128
      %27 = vsyncadd [#allocation6], %s26
      %s29 = sshll.u32 [#allocation5], 4
      %s30 = int_to_ptr.vmem [resolvable:$true] %s29
      %32 = dma.hbm_to_vmem [thread:$0]  %s1, 128, %s30, [#allocation6]
    $region9: #{tpu_custom_call.1} parent=1 // pred_fallthru
      _
    // Predicated region
    $region10: #{tpu_custom_call.1} parent=1 // pred_check
      _
    $region11: #{tpu_custom_call.1} parent=1 // pred_check_branch
      %34 = sbr.rel (0) target = $region13
    $region12: #{tpu_custom_call.1} parent=1 // pred_region
      %s36 = ssub.s32 128, 128
      %37 = vsyncadd [#allocation6], %s36
      %s39 = sshll.u32 [#allocation7], 4
      %s40 = int_to_ptr.vmem [resolvable:$true] %s39
      %42 = dma.hbm_to_vmem [thread:$0]  %s2, 128, %s40, [#allocation6]
    $region13: #{tpu_custom_call.1} parent=1 // pred_fallthru
      _
    // Predicated region
    $region14: #{tpu_custom_call.1} parent=1 // pred_check
      _
    $region15: #{tpu_custom_call.1} parent=1 // pred_check_branch
      %44 = sbr.rel (0) target = $region17
    $region16: #{tpu_custom_call.1} parent=1 // pred_region
      %s46 = ssub.s32 512, 512
      %47 = vsyncadd [#allocation9], %s46
      %s48 = sshll.u32 [#allocation8], 4
      %s49 = int_to_ptr.vmem [resolvable:$true] %s48
      %54 = dma.hbm_to_vmem [thread:$0]  %s3, 512, %s49, [#allocation9], 128, 128, 8
    $region17: #{tpu_custom_call.1} parent=1 // pred_fallthru
      _
    // Predicated region
    $region18: #{tpu_custom_call.1} parent=1 // pred_check
      _
    $region19: #{tpu_custom_call.1} parent=1 // pred_check_branch
      %56 = sbr.rel (0) target = $region21
    $region20: #{tpu_custom_call.1} parent=1 // pred_region
      %57 = dma.done [#allocation3], 128
    $region21: #{tpu_custom_call.1} parent=1 // pred_fallthru
      _
    // Predicated region
    $region22: #{tpu_custom_call.1} parent=1 // pred_check
      _
    $region23: #{tpu_custom_call.1} parent=1 // pred_check_branch
      %59 = sbr.rel (0) target = $region25
    $region24: #{tpu_custom_call.1} parent=1 // pred_region
      %60 = dma.done [#allocation6], 128
    $region25: #{tpu_custom_call.1} parent=1 // pred_fallthru
      _
    // Predicated region
    $region26: #{tpu_custom_call.1} parent=1 // pred_check
      _
    $region27: #{tpu_custom_call.1} parent=1 // pred_check_branch
      %62 = sbr.rel (0) target = $region29
    $region28: #{tpu_custom_call.1} parent=1 // pred_region
      %63 = dma.done [#allocation6], 128
    $region29: #{tpu_custom_call.1} parent=1 // pred_fallthru
      _
    // Predicated region
    $region30: #{tpu_custom_call.1} parent=1 // pred_check
      _
    $region31: #{tpu_custom_call.1} parent=1 // pred_check_branch
      %65 = sbr.rel (0) target = $region33
    $region32: #{tpu_custom_call.1} parent=1 // pred_region
      %66 = dma.done [#allocation9], 512
    $region33: #{tpu_custom_call.1} parent=1 // pred_fallthru
      _
    %v67 = vld [vmem:[#allocation2] sm:$0xff]
    %v68 = vld [vmem:[#allocation5] sm:$0xff]
    %v69 = vld [vmem:[#allocation7] sm:$0xff]
    %v70 = vld [vmem:[#allocation8] sm:$0xff]
    %v71 = vld [vmem:[#allocation8 + $0x8] sm:$0xff]
    %v72 = vlaneseq
    %v73 = vshrl.u32 %v72, 7
    %v74 = vsub.s32 0, %v73
    %v75 = vrot.slane %v69, %v74
    %vm76 = vcmask 130048
    %v78 = vsel %vm76, %v67, 0
    %80 = vmatprep.subr.mxu0 0.0
    %81 = vmatpush1.msra.mxu0 0.0
    %82 = vmatprep.subr.mxu0 0.0
    %83 = vmatpush1.msra.mxu0 0.0
    %84 = vmatprep.subr.mxu0 0.0
    %85 = vmatpush1.msra.mxu0 0.0
    %86 = vmatprep.subr.mxu0 0.0
    %87 = vmatpush1.msra.mxu0 0.0
    %88 = vmatprep.subr.mxu0 0.0
    %89 = vmatpush1.msra.mxu0 0.0
    %90 = vmatprep.subr.mxu0 0.0
    %91 = vmatpush1.msra.mxu0 0.0
    %92 = vmatprep.subr.mxu0 0.0
    %93 = vmatpush1.msra.mxu0 0.0
    %94 = vmatprep.subr.mxu0 0.0
    %95 = vmatpush1.msra.mxu0 0.0
    %96 = vmatprep.subr.mxu0 0.0
    %97 = vmatpush1.msra.mxu0 0.0
    %98 = vmatprep.subr.mxu0 0.0
    %99 = vmatpush1.msra.mxu0 0.0
    %100 = vmatprep.subr.mxu0 0.0
    %101 = vmatpush1.msra.mxu0 0.0
    %102 = vmatprep.subr.mxu0 0.0
    %103 = vmatpush1.msra.mxu0 0.0
    %104 = vmatprep.subr.mxu0 0.0
    %105 = vmatpush1.msra.mxu0 0.0
    %106 = vmatprep.subr.mxu0 0.0
    %107 = vmatpush1.msra.mxu0 0.0
    %108 = vmatprep.subr.mxu0 0.0
    %109 = vmatpush1.msra.mxu0 %v71
    %110 = vmatprep.subr.mxu0 0.0
    %111 = vmatpush1.msra.mxu0 %v70
    %112 = vmatprep.subr.mxu0 0.0
    %113 = vmatpush2.msra.mxu0 0.0
    %114 = vmatprep.subr.mxu0 0.0
    %115 = vmatpush2.msra.mxu0 0.0
    %116 = vmatprep.subr.mxu0 0.0
    %117 = vmatpush2.msra.mxu0 0.0
    %118 = vmatprep.subr.mxu0 0.0
    %119 = vmatpush2.msra.mxu0 0.0
    %120 = vmatprep.subr.mxu0 0.0
    %121 = vmatpush2.msra.mxu0 0.0
    %122 = vmatprep.subr.mxu0 0.0
    %123 = vmatpush2.msra.mxu0 0.0
    %124 = vmatprep.subr.mxu0 0.0
    %125 = vmatpush2.msra.mxu0 0.0
    %126 = vmatprep.subr.mxu0 0.0
    %127 = vmatpush2.msra.mxu0 0.0
    %128 = vmatprep.subr.mxu0 0.0
    %129 = vmatpush2.msra.mxu0 0.0
    %130 = vmatprep.subr.mxu0 0.0
    %131 = vmatpush2.msra.mxu0 0.0
    %132 = vmatprep.subr.mxu0 0.0
    %133 = vmatpush2.msra.mxu0 0.0
    %134 = vmatprep.subr.mxu0 0.0
    %135 = vmatpush2.msra.mxu0 0.0
    %136 = vmatprep.subr.mxu0 0.0
    %137 = vmatpush2.msra.mxu0 0.0
    %138 = vmatprep.subr.mxu0 0.0
    %139 = vmatpush2.msra.mxu0 0.0
    %140 = vmatprep.subr.mxu0 0.0
    %141 = vmatpush2.msra.mxu0 0.0
    %142 = vmatprep.subr.mxu0 0.0
    %143 = vmatpush2.msra.mxu0 0.0
    %144 = vmatprep.mubr.f32.mxu0 0.0
    %145 = vmatmul.mubr.f32.gmra.mxu0 %v78
    %v146 = vpop.f32.mrf.mxu0
    %v147 = vadd.f32 %v75, %v146
    %v148 = vpop.f32.mrf.mxu0
    %149 = vdwg.mxu0
    %v150 = vmul.f32 %v147, %v147
    %152 = vrot.lane.b32.xlu0 %v150, 16
    %v153 = vpop.permute.xlu0 %152
    %v155 = vsel %vm76, %v147, %v153
    %vm156 = vcmask 261120
    %v157 = vsel %vm156, %v155, 0.0
    %v158 = vrot.slane %v157, 4
    %v159 = vadd.f32 %v157, %v158
    %v160 = vrot.slane %v159, 2
    %v161 = vadd.f32 %v159, %v160
    %v162 = vrot.slane %v161, 1
    %v163 = vadd.f32 %v161, %v162
    %v164 = vrcp.pop 8.0
    %v165 = vmul.f32 %v163, %v164
    %v166 = vmul.f32 %v165, %v165
    %168 = vrot.lane.b32.xlu0 %v166, 16
    %v169 = vpop.permute.xlu0 %168
    %v171 = vsub.f32 %v165, %v169
    %v172 = vsub.f32 %v147, %v165
    %v173 = vadd.f32 %v171, 1e-05
    %v174 = vrsqrt.pop %v173
    %v175 = vlaneseq
    %v176 = vshrl.u32 %v175, 7
    %v177 = vsub.s32 0, %v176
    %v178 = vrot.slane %v174, %v177
    %180 = vrot.lane.b32.xlu0 %v178, 112
    %v181 = vpop.permute.xlu0 %180
    %v183 = vmul.f32 %v172, %v181
    %v184 = vlaneseq
    %v185 = vshrl.u32 %v184, 7
    %v186 = vsub.s32 1, %v185
    %v187 = vrot.slane %v69, %v186
    %v188 = vmul.f32 %v183, %v187
    %v189 = vlaneseq
    %v190 = vshrl.u32 %v189, 7
    %v191 = vsub.s32 2, %v190
    %v192 = vrot.slane %v69, %v191
    %v193 = vadd.f32 %v188, %v192
    %v194 = vand.u32 2147483647, %v193
    %v195 = vsel %vm76, %v194, -inf
    %196 = vmax.xlane.f32.xlu0 %v195
    %v197 = vpop.xlane.xlu0 %196
    %v198 = vmul.f32 %v197, 3.0
    %vm199 = vcmp.eq.f32.partialorder %v68, 0.0
    %v200 = vmul.f32 %v68, %v198
    %v201 = vsel %vm199, %v193, %v200
    %s202 = scalar_lea.vmem [#allocation8], 16
    %v203 = vld [vmem:[%s202] sm:$0xff]
    %v204 = vld [vmem:[%s202 + $0x8] sm:$0xff]
    %v205 = vlaneseq
    %v206 = vshrl.u32 %v205, 7
    %v207 = vsub.s32 3, %v206
    %v208 = vrot.slane %v69, %v207
    %v210 = vsel %vm76, %v201, 0
    %212 = vmatprep.subr.mxu0 0.0
    %213 = vmatpush1.msra.mxu0 0.0
    %214 = vmatprep.subr.mxu0 0.0
    %215 = vmatpush1.msra.mxu0 0.0
    %216 = vmatprep.subr.mxu0 0.0
    %217 = vmatpush1.msra.mxu0 0.0
    %218 = vmatprep.subr.mxu0 0.0
    %219 = vmatpush1.msra.mxu0 0.0
    %220 = vmatprep.subr.mxu0 0.0
    %221 = vmatpush1.msra.mxu0 0.0
    %222 = vmatprep.subr.mxu0 0.0
    %223 = vmatpush1.msra.mxu0 0.0
    %224 = vmatprep.subr.mxu0 0.0
    %225 = vmatpush1.msra.mxu0 0.0
    %226 = vmatprep.subr.mxu0 0.0
    %227 = vmatpush1.msra.mxu0 0.0
    %228 = vmatprep.subr.mxu0 0.0
    %229 = vmatpush1.msra.mxu0 0.0
    %230 = vmatprep.subr.mxu0 0.0
    %231 = vmatpush1.msra.mxu0 0.0
    %232 = vmatprep.subr.mxu0 0.0
    %233 = vmatpush1.msra.mxu0 0.0
    %234 = vmatprep.subr.mxu0 0.0
    %235 = vmatpush1.msra.mxu0 0.0
    %236 = vmatprep.subr.mxu0 0.0
    %237 = vmatpush1.msra.mxu0 0.0
    %238 = vmatprep.subr.mxu0 0.0
    %239 = vmatpush1.msra.mxu0 0.0
    %240 = vmatprep.subr.mxu0 0.0
    %241 = vmatpush1.msra.mxu0 %v204
    %242 = vmatprep.subr.mxu0 0.0
    %243 = vmatpush1.msra.mxu0 %v203
    %244 = vmatprep.subr.mxu0 0.0
    %245 = vmatpush2.msra.mxu0 0.0
    %246 = vmatprep.subr.mxu0 0.0
    %247 = vmatpush2.msra.mxu0 0.0
    %248 = vmatprep.subr.mxu0 0.0
    %249 = vmatpush2.msra.mxu0 0.0
    %250 = vmatprep.subr.mxu0 0.0
    %251 = vmatpush2.msra.mxu0 0.0
    %252 = vmatprep.subr.mxu0 0.0
    %253 = vmatpush2.msra.mxu0 0.0
    %254 = vmatprep.subr.mxu0 0.0
    %255 = vmatpush2.msra.mxu0 0.0
    %256 = vmatprep.subr.mxu0 0.0
    %257 = vmatpush2.msra.mxu0 0.0
    %258 = vmatprep.subr.mxu0 0.0
    %259 = vmatpush2.msra.mxu0 0.0
    %260 = vmatprep.subr.mxu0 0.0
    %261 = vmatpush2.msra.mxu0 0.0
    %262 = vmatprep.subr.mxu0 0.0
    %263 = vmatpush2.msra.mxu0 0.0
    %264 = vmatprep.subr.mxu0 0.0
    %265 = vmatpush2.msra.mxu0 0.0
    %266 = vmatprep.subr.mxu0 0.0
    %267 = vmatpush2.msra.mxu0 0.0
    %268 = vmatprep.subr.mxu0 0.0
    %269 = vmatpush2.msra.mxu0 0.0
    %270 = vmatprep.subr.mxu0 0.0
    %271 = vmatpush2.msra.mxu0 0.0
    %272 = vmatprep.subr.mxu0 0.0
    %273 = vmatpush2.msra.mxu0 0.0
    %274 = vmatprep.subr.mxu0 0.0
    %275 = vmatpush2.msra.mxu0 0.0
    %276 = vmatprep.mubr.f32.mxu0 0.0
    %277 = vmatmul.mubr.f32.gmra.mxu0 %v210
    %v278 = vpop.f32.mrf.mxu0
    %v279 = vadd.f32 %v208, %v278
    %v280 = vpop.f32.mrf.mxu0
    %281 = vdwg.mxu0
    %v282 = vmul.f32 %v279, %v279
    %284 = vrot.lane.b32.xlu0 %v282, 16
    %v285 = vpop.permute.xlu0 %284
    %v287 = vsel %vm76, %v279, %v285
    %v288 = vsel %vm156, %v287, 0.0
    %v289 = vrot.slane %v288, 4
    %v290 = vadd.f32 %v288, %v289
    %v291 = vrot.slane %v290, 2
    %v292 = vadd.f32 %v290, %v291
    %v293 = vrot.slane %v292, 1
    %v294 = vadd.f32 %v292, %v293
    %v295 = vmul.f32 %v294, %v164
    %v296 = vmul.f32 %v295, %v295
    %298 = vrot.lane.b32.xlu0 %v296, 16
    %v299 = vpop.permute.xlu0 %298
    %v301 = vsub.f32 %v295, %v299
    %v302 = vsub.f32 %v279, %v295
    %v303 = vadd.f32 %v301, 1e-05
    %v304 = vrsqrt.pop %v303
    %v305 = vlaneseq
    %v306 = vshrl.u32 %v305, 7
    %v307 = vsub.s32 0, %v306
    %v308 = vrot.slane %v304, %v307
    %310 = vrot.lane.b32.xlu0 %v308, 112
    %v311 = vpop.permute.xlu0 %310
    %v313 = vmul.f32 %v302, %v311
    %v314 = vlaneseq
    %v315 = vshrl.u32 %v314, 7
    %v316 = vsub.s32 4, %v315
    %v317 = vrot.slane %v69, %v316
    %v318 = vmul.f32 %v313, %v317
    %v319 = vlaneseq
    %v320 = vshrl.u32 %v319, 7
    %v321 = vsub.s32 5, %v320
    %v322 = vrot.slane %v69, %v321
    %v323 = vadd.f32 %v318, %v322
    %v324 = vand.u32 2147483647, %v323
    %v325 = vsel %vm76, %v324, -inf
    %326 = vmax.xlane.f32.xlu0 %v325
    %v327 = vpop.xlane.xlu0 %326
    %v328 = vmul.f32 %v327, 3.0
    %v329 = vmul.f32 %v68, %v328
    %v330 = vsel %vm199, %v323, %v329
    %331 = vst.msk [vmem:[#allocation10] sm:$0xff] %vm76, %v330
    // Predicated region
    $region34: #{tpu_custom_call.1} parent=1 // pred_check
      _
    $region35: #{tpu_custom_call.1} parent=1 // pred_check_branch
      %333 = sbr.rel (0) target = $region37
    $region36: #{tpu_custom_call.1} parent=1 // pred_region
      %s335 = ssub.s32 128, 128
      %336 = vsyncadd [#allocation4], %s335
      %s338 = sshll.u32 [#allocation10], 4
      %s339 = int_to_ptr.vmem [resolvable:$true] %s338
      %341 = dma.vmem_to_hbm [thread:$0]  %s339, 128, %s4, [#allocation4]
    $region37: #{tpu_custom_call.1} parent=1 // pred_fallthru
      _
    // Predicated region
    $region38: #{tpu_custom_call.1} parent=1 // pred_check
      _
    $region39: #{tpu_custom_call.1} parent=1 // pred_check_branch
      %343 = sbr.rel (0) target = $region41
    $region40: #{tpu_custom_call.1} parent=1 // pred_region
      %344 = dma.done [#allocation4], 128
    $region41: #{tpu_custom_call.1} parent=1 // pred_fallthru
      _
    %345 = vsyncpa [#allocation3], 1
    %346 = vsyncpa [#allocation6], 1
    %347 = vsyncpa [#allocation9], 1
    %348 = vsyncpa [#allocation4], 1

</llo_original>
